<compile_context>
chip_gen: v7x
topology: tpu7x:2x2x1
jax: 0.10.0
libtpu: 0.0.40
codegen_flags: <defaults>
</compile_context>

<pallas_src>
import jax
import jax.numpy as jnp
from jax.experimental import pallas as pl
from jax.experimental.pallas import tpu as pltpu


def _make_divisible(v, divisor, min_value=None):
    if min_value is None:
        min_value = divisor
    new_v = max(min_value, int(v + divisor / 2) // divisor * divisor)
    if new_v < 0.9 * v:
        new_v += divisor
    return new_v


def _pick_bt(B, C, HW, itemsize):
    """Images per grid step: ~2 MiB input tile, prefer >=4 grid steps, divisor of B."""
    bytes_cap = max(1, (2 << 20) // max(1, C * HW * itemsize))
    grid_cap = max(1, B // 4)          # keep >= 4 steps when the batch allows it
    cap = max(1, min(bytes_cap, grid_cap, B))
    for bt in range(cap, 0, -1):       # largest divisor of B <= cap (full blocks)
        if B % bt == 0:
            return bt
    return 1


def _se_kernel(x_ref, w1_ref, b1_ref, w2t_ref, b2_ref, o_ref):
    # x_ref / o_ref : (Bt, C, HW)   Bt images' feature maps (native dtype)
    # w1_ref        : (hidden, C)   fc1 weight, PyTorch layout (lane-dense over C)
    # b1_ref        : (1, hidden)
    # w2t_ref       : (hidden, C)   fc2 weight transposed (lane-dense over C)
    # b2_ref        : (1, C)
    x = x_ref[...]                                           # native dtype (no f32 copy)
    inv_hw = 1.0 / x.shape[-1]

    # Global average pool over spatial (lane reduce), accumulate in f32 -> (Bt, C)
    pooled = jnp.sum(x, axis=-1, dtype=jnp.float32) * inv_hw

    # fc1 + ReLU:  (Bt, C) x (hidden, C) -> (Bt, hidden)   (f32 accumulation)
    w1 = w1_ref[...].astype(jnp.float32)
    h1 = jnp.einsum("bc,hc->bh", pooled, w1,
                    preferred_element_type=jnp.float32,
                    precision=jax.lax.Precision.HIGHEST)
    h1 = jnp.maximum(h1 + b1_ref[...].astype(jnp.float32), 0.0)

    # fc2:  (Bt, hidden) x (hidden, C) -> (Bt, C)
    w2t = w2t_ref[...].astype(jnp.float32)
    y = jnp.einsum("bh,hc->bc", h1, w2t,
                   preferred_element_type=jnp.float32,
                   precision=jax.lax.Precision.HIGHEST)
    y = y + b2_ref[...].astype(jnp.float32)

    # h_sigmoid gate: relu6(y + 3) / 6                       -> (Bt, C) f32
    gate = jnp.clip(y + 3.0, 0.0, 6.0) * (1.0 / 6.0)

    # Channel-wise scale in the activation's native dtype (lane broadcast).
    o_ref[...] = x * gate.astype(x.dtype)[:, :, None]


@jax.jit
def se_layer(x, w1, b1, w2, b2):
    """Fused SELayer forward.

    x  : (B, C, H, W)  activation, NCHW (f32 or bf16)
    w1 : (hidden, C)   fc1 weight (PyTorch nn.Linear layout)
    b1 : (hidden,)
    w2 : (C, hidden)   fc2 weight
    b2 : (C,)
    """
    B, C, H, W = x.shape
    HW = H * W
    hidden = w1.shape[0]
    itemsize = jnp.dtype(x.dtype).itemsize

    x3 = x.reshape(B, C, HW)           # contiguous merge of trailing dims: free
    w2t = jnp.transpose(w2)            # (hidden, C), tiny, done once
    b1r = b1.reshape(1, hidden)
    b2r = b2.reshape(1, C)

    bt = _pick_bt(B, C, HW, itemsize)
    grid = (B // bt,)

    cost = pl.CostEstimate(
        flops=int(2 * B * C * HW + 4 * B * C * hidden),
        transcendentals=0,
        bytes_accessed=int(2 * B * C * HW * itemsize + 2 * hidden * C * 4),
    )

    out3 = pl.pallas_call(
        _se_kernel,
        out_shape=jax.ShapeDtypeStruct((B, C, HW), x.dtype),
        grid_spec=pltpu.PrefetchScalarGridSpec(
            num_scalar_prefetch=0,
            grid=grid,
            in_specs=[
                pl.BlockSpec((bt, C, HW), lambda b: (b, 0, 0)),   # x tile
                pl.BlockSpec((hidden, C), lambda b: (0, 0)),      # W1 (VMEM resident)
                pl.BlockSpec((1, hidden), lambda b: (0, 0)),      # b1
                pl.BlockSpec((hidden, C), lambda b: (0, 0)),      # W2.T
                pl.BlockSpec((1, C), lambda b: (0, 0)),           # b2
            ],
            out_specs=pl.BlockSpec((bt, C, HW), lambda b: (b, 0, 0)),
        ),
        compiler_params=pltpu.CompilerParams(
            dimension_semantics=("parallel",),
            vmem_limit_bytes=32 * 1024 * 1024,
        ),
        cost_estimate=cost,
    )(x3, w1, b1r, w2t, b2r)

    return out3.reshape(B, C, H, W)


def _se_ref(x, w1, b1, w2, b2):
    xf = x.astype(jnp.float32)
    y = jnp.mean(xf, axis=(2, 3))                                 # (B, C)
    y = jnp.maximum(y @ w1.astype(jnp.float32).T + b1, 0.0)       # (B, hidden)
    y = y @ w2.astype(jnp.float32).T + b2                         # (B, C)
    y = jnp.clip(y + 3.0, 0.0, 6.0) / 6.0                         # h_sigmoid
    return (xf * y[:, :, None, None]).astype(x.dtype)


if __name__ == "__main__":
    key = jax.random.PRNGKey(0)
    B, C, H, W = 4, 16, 16, 16
    reduction = 4
    hidden = _make_divisible(C // reduction, 8)   # -> 8

    k1, k2, k3, k4, k5 = jax.random.split(key, 5)
    x = jax.random.normal(k1, (B, C, H, W), dtype=jnp.float32)
    w1 = jax.random.normal(k2, (hidden, C), dtype=jnp.float32) * 0.3
    b1 = jax.random.normal(k3, (hidden,), dtype=jnp.float32) * 0.1
    w2 = jax.random.normal(k4, (C, hidden), dtype=jnp.float32) * 0.3
    b2 = jax.random.normal(k5, (C,), dtype=jnp.float32) * 0.1

    # f32 path
    y = jax.block_until_ready(se_layer(x, w1, b1, w2, b2))
    y_ref = _se_ref(x, w1, b1, w2, b2)
    assert y.shape == x.shape and y.dtype == x.dtype
    err = float(jnp.max(jnp.abs(y - y_ref)))
    assert jnp.allclose(y, y_ref, atol=1e-4, rtol=1e-4), err

    # bf16 activation path (halves HBM traffic on all chips)
    xb = x.astype(jnp.bfloat16)
    yb = jax.block_until_ready(se_layer(xb, w1, b1, w2, b2))
    yb_ref = _se_ref(xb, w1, b1, w2, b2)
    assert yb.dtype == jnp.bfloat16
    errb = float(jnp.max(jnp.abs(yb.astype(jnp.float32) - yb_ref.astype(jnp.float32))))
    assert errb < 0.1, errb

    print("KERNEL_OK")
</pallas_src>

<mosaic_0001>
module attributes {stable_mosaic.version = 11 : i64} {
  func.func @_se_kernel(%arg0: i32, %arg1: memref<1x16x256xf32, #tpu.memory_space<vmem>>, %arg2: memref<8x16xf32, #tpu.memory_space<vmem>>, %arg3: memref<1x8xf32, #tpu.memory_space<vmem>>, %arg4: memref<8x16xf32, #tpu.memory_space<vmem>>, %arg5: memref<1x16xf32, #tpu.memory_space<vmem>>, %arg6: memref<1x16x256xf32, #tpu.memory_space<vmem>>) attributes {dimension_semantics = [#tpu.dimension_semantics<parallel>], iteration_bounds = array<i64: 4>, scalar_prefetch = 0 : i64, scratch_operands = 0 : i64, tpu.core_type = #tpu.core_type<tc>, window_params = [{transform_indices = @transform_0, window_bounds = array<i64: 1, 16, 256>}, {pipeline_mode = #tpu.pipeline_mode<synchronous>, transform_indices = @transform_1, window_bounds = array<i64: 8, 16>}, {pipeline_mode = #tpu.pipeline_mode<synchronous>, transform_indices = @transform_2, window_bounds = array<i64: 1, 8>}, {pipeline_mode = #tpu.pipeline_mode<synchronous>, transform_indices = @transform_3, window_bounds = array<i64: 8, 16>}, {pipeline_mode = #tpu.pipeline_mode<synchronous>, transform_indices = @transform_4, window_bounds = array<i64: 1, 16>}, {transform_indices = @transform_5, window_bounds = array<i64: 1, 16, 256>}]} {
    %c0 = arith.constant 0 : index
    %c0_0 = arith.constant 0 : index
    %c0_1 = arith.constant 0 : index
    %0 = vector.load %arg1[%c0, %c0_0, %c0_1] : memref<1x16x256xf32, #tpu.memory_space<vmem>>, vector<1x16x256xf32>
    %cst = arith.constant dense<0.000000e+00> : vector<1x16xf32>
    %1 = vector.multi_reduction <add>, %0, %cst [2] : vector<1x16x256xf32> to vector<1x16xf32>
    %cst_2 = arith.constant 3.906250e-03 : f32
    %2 = vector.broadcast %cst_2 : f32 to vector<1x16xf32>
    %3 = arith.mulf %1, %2 : vector<1x16xf32>
    %c0_3 = arith.constant 0 : index
    %c0_4 = arith.constant 0 : index
    %4 = vector.load %arg2[%c0_3, %c0_4] : memref<8x16xf32, #tpu.memory_space<vmem>>, vector<8x16xf32>
    "tpu.trace_start"() <{level = 10 : i32, message = "bc,hc->bh"}> : () -> ()
    %cst_5 = arith.constant dense<0.000000e+00> : vector<1x8xf32>
    %5 = tpu.matmul %3, %4, %cst_5 {dimension_numbers = #tpu.dot_dimension_numbers<[1], [1], [0], [0], [0, 0, 1, 0], [], []>, precision = #tpu.contract_precision<fp32>} : vector<1x16xf32>, vector<8x16xf32>, vector<1x8xf32> -> vector<1x8xf32>
    "tpu.trace_stop"() : () -> ()
    %c0_6 = arith.constant 0 : index
    %c0_7 = arith.constant 0 : index
    %6 = vector.load %arg3[%c0_6, %c0_7] : memref<1x8xf32, #tpu.memory_space<vmem>>, vector<1x8xf32>
    %7 = arith.addf %5, %6 : vector<1x8xf32>
    %cst_8 = arith.constant 0.000000e+00 : f32
    %8 = vector.broadcast %cst_8 : f32 to vector<1x8xf32>
    %9 = arith.maximumf %7, %8 : vector<1x8xf32>
    %c0_9 = arith.constant 0 : index
    %c0_10 = arith.constant 0 : index
    %10 = vector.load %arg4[%c0_9, %c0_10] : memref<8x16xf32, #tpu.memory_space<vmem>>, vector<8x16xf32>
    "tpu.trace_start"() <{level = 10 : i32, message = "bh,hc->bc"}> : () -> ()
    %cst_11 = arith.constant dense<0.000000e+00> : vector<1x16xf32>
    %11 = tpu.matmul %9, %10, %cst_11 {dimension_numbers = #tpu.dot_dimension_numbers<[1], [0], [0], [1], [0, 0, 1, 1], [], []>, precision = #tpu.contract_precision<fp32>} : vector<1x8xf32>, vector<8x16xf32>, vector<1x16xf32> -> vector<1x16xf32>
    "tpu.trace_stop"() : () -> ()
    %c0_12 = arith.constant 0 : index
    %c0_13 = arith.constant 0 : index
    %12 = vector.load %arg5[%c0_12, %c0_13] : memref<1x16xf32, #tpu.memory_space<vmem>>, vector<1x16xf32>
    %13 = arith.addf %11, %12 : vector<1x16xf32>
    %cst_14 = arith.constant 3.000000e+00 : f32
    %14 = vector.broadcast %cst_14 : f32 to vector<1x16xf32>
    %15 = arith.addf %13, %14 : vector<1x16xf32>
    %cst_15 = arith.constant 0.000000e+00 : f32
    %cst_16 = arith.constant 6.000000e+00 : f32
    %16 = vector.broadcast %cst_15 : f32 to vector<1x16xf32>
    %17 = arith.maximumf %16, %15 : vector<1x16xf32>
    %18 = vector.broadcast %cst_16 : f32 to vector<1x16xf32>
    %19 = arith.minimumf %18, %17 : vector<1x16xf32>
    %cst_17 = arith.constant 0.166666672 : f32
    %20 = vector.broadcast %cst_17 : f32 to vector<1x16xf32>
    %21 = arith.mulf %19, %20 : vector<1x16xf32>
    %22 = vector.shape_cast %21 : vector<1x16xf32> to vector<1x16x1xf32>
    %23 = vector.broadcast %22 : vector<1x16x1xf32> to vector<1x16x256xf32>
    %24 = arith.mulf %0, %23 : vector<1x16x256xf32>
    %c0_18 = arith.constant 0 : index
    %c0_19 = arith.constant 0 : index
    %c0_20 = arith.constant 0 : index
    %25 = vector.load %arg6[%c0_18, %c0_19, %c0_20] : memref<1x16x256xf32, #tpu.memory_space<vmem>>, vector<1x16x256xf32>
    tpu.vector_store %arg6[%c0_18, %c0_19, %c0_20], %24 {strides = array<i32>} : memref<1x16x256xf32, #tpu.memory_space<vmem>>, vector<1x16x256xf32>,
    return
  }
  func.func @transform_0(%arg0: i32) -> (i32, i32, i32) {
    %c0_i32 = arith.constant 0 : i32
    %c0_i32_0 = arith.constant 0 : i32
    %c0_i32_1 = arith.constant 0 : i32
    return %arg0, %c0_i32, %c0_i32_0 : i32, i32, i32
  }
  func.func @transform_1(%arg0: i32) -> (i32, i32) {
    %c0_i32 = arith.constant 0 : i32
    %c0_i32_0 = arith.constant 0 : i32
    %c0_i32_1 = arith.constant 0 : i32
    return %c0_i32, %c0_i32_0 : i32, i32
  }
  func.func @transform_2(%arg0: i32) -> (i32, i32) {
    %c0_i32 = arith.constant 0 : i32
    %c0_i32_0 = arith.constant 0 : i32
    %c0_i32_1 = arith.constant 0 : i32
    return %c0_i32, %c0_i32_0 : i32, i32
  }
  func.func @transform_3(%arg0: i32) -> (i32, i32) {
    %c0_i32 = arith.constant 0 : i32
    %c0_i32_0 = arith.constant 0 : i32
    %c0_i32_1 = arith.constant 0 : i32
    return %c0_i32, %c0_i32_0 : i32, i32
  }
  func.func @transform_4(%arg0: i32) -> (i32, i32) {
    %c0_i32 = arith.constant 0 : i32
    %c0_i32_0 = arith.constant 0 : i32
    %c0_i32_1 = arith.constant 0 : i32
    return %c0_i32, %c0_i32_0 : i32, i32
  }
  func.func @transform_5(%arg0: i32) -> (i32, i32, i32) {
    %c0_i32 = arith.constant 0 : i32
    %c0_i32_0 = arith.constant 0 : i32
    %c0_i32_1 = arith.constant 0 : i32
    return %arg0, %c0_i32, %c0_i32_0 : i32, i32, i32
  }
}

</mosaic_0001>

<llo_original>
// kernel: se_layer.1
$region0: #{se_layer.1}
  #allocation0 [shape = 'u32[]', space=smem, size = 0x4, offset = 0x4, fixed_abs, tag = 'smem constant byte address 0x4 - core index']
  #allocation1 [shape = 'u32[144,128]{1,0:T(1,128)}', space=vmem, size = 0x12000, scoped, tag = 'internal scratch']
  %s0 = inlined_call_operand.vmem [shape: f32[4,16,256], index: 0, kind: input, shape index: {}]
  %s1 = inlined_call_operand.vmem [shape: f32[8,16], index: 1, kind: input, shape index: {}]
  %s2 = inlined_call_operand.vmem [shape: f32[1,8], index: 2, kind: input, shape index: {}]
  %s3 = inlined_call_operand.vmem [shape: f32[8,16], index: 3, kind: input, shape index: {}]
  %s4 = inlined_call_operand.vmem [shape: f32[1,16], index: 4, kind: input, shape index: {}]
  %s5 = inlined_call_operand.vmem [shape: f32[4,16,256], index: 5, kind: output, shape index: {}]
  %s6 = sld [smem:[#allocation0]]
  $region53: #{se_layer.1} parent=0
    _
  %s8 = ssub.s32 1, %s6
  %s9 = scalar_select 0, %s8, %s6
  loop: start=0, step=1, limit=6
  $region2: #{se_layer.1} parent=0 // loop_pre_header
    _
  $region3: #{se_layer.1} parent=0 // loop_header
    %s11 = sphi 0, %s15
    %p12 = scmp.ge.s32.totalorder %s11, 6
    %s21 = sphi 0, %s23
    %s24 = sphi 0, %s21
    %s25 = sphi 0, %s24
    %s41 = sphi 0, %s25
    %s45 = sphi 0, %s45
    %s47 = sphi 0, %s45
    %s48 = sphi 0, %s47
    %s62 = sphi 0, %s48
    %s66 = sphi 0, %s66
    %s68 = sphi 0, %s66
    %s69 = sphi 0, %s68
    %s83 = sphi 0, %s69
    %s87 = sphi 0, %s87
    %s89 = sphi 0, %s87
    %s90 = sphi 0, %s89
    %s104 = sphi 0, %s90
    %s108 = sphi 0, %s108
    %s110 = sphi 0, %s108
    %s111 = sphi 0, %s110
    %s125 = sphi 0, %s111
    %s131 = sphi 0, %s133
    %s134 = sphi 0, %s131
    %s135 = sphi 0, %s134
    %s151 = sphi 0, %s135
  $region4: #{se_layer.1} parent=0 // loop_header_branch
    %14 = sbr.rel (%p12) target = $region8
  $region5: #{se_layer.1} parent=0 // loop_body
    %s16 = ssub.s32 %s11, 1
    %s17 = ssub.s32 %s11, 2
    %s18 = sadd.s32 %s11, 1
    %s19 = ssub.s32 %s11, %s18
    %p20 = scmp.eq.s32.totalorder %s19, 0
    %s22 = sadd.s32 %s21, 1
    %s23 = scalar_select %p20, %s21, %s22
    %p26 = pneg %p20
    %p27 = scmp.eq.s32.totalorder %s11, 3
    %p28 = por %p26, %p27
    %p29 = scmp.ne.s32.totalorder %s21, %s24
    %p30 = scmp.eq.s32.totalorder %s11, 0
    %p31 = por %p29, %p30
    %p32 = scmp.ne.s32.totalorder %s21, %s24
    %p33 = scmp.eq.s32.totalorder %s16, 3
    %p34 = por %p32, %p33
    %p35 = scmp.ne.s32.totalorder %s24, %s25
    %p36 = scmp.eq.s32.totalorder %s16, 0
    %p37 = por %p35, %p36
    %p38 = scmp.ne.s32.totalorder %s24, %s25
    %p39 = scmp.eq.s32.totalorder %s17, 3
    %p40 = por %p38, %p39
    %p42 = scmp.ne.s32.totalorder %s25, %s41
    %p43 = scmp.eq.s32.totalorder %s17, 0
    %p44 = por %p42, %p43
    %s46 = sadd.s32 %s45, 1
    %p49 = scmp.eq.s32.totalorder %s11, 3
    %p50 = scmp.ne.s32.totalorder %s45, %s47
    %p51 = scmp.eq.s32.totalorder %s11, 0
    %p52 = por %p50, %p51
    %p53 = scmp.ne.s32.totalorder %s45, %s47
    %p54 = scmp.eq.s32.totalorder %s16, 3
    %p55 = por %p53, %p54
    %p56 = scmp.ne.s32.totalorder %s47, %s48
    %p57 = scmp.eq.s32.totalorder %s16, 0
    %p58 = por %p56, %p57
    %p59 = scmp.ne.s32.totalorder %s47, %s48
    %p60 = scmp.eq.s32.totalorder %s17, 3
    %p61 = por %p59, %p60
    %p63 = scmp.ne.s32.totalorder %s48, %s62
    %p64 = scmp.eq.s32.totalorder %s17, 0
    %p65 = por %p63, %p64
    %s67 = sadd.s32 %s66, 1
    %p70 = scmp.eq.s32.totalorder %s11, 3
    %p71 = scmp.ne.s32.totalorder %s66, %s68
    %p72 = scmp.eq.s32.totalorder %s11, 0
    %p73 = por %p71, %p72
    %p74 = scmp.ne.s32.totalorder %s66, %s68
    %p75 = scmp.eq.s32.totalorder %s16, 3
    %p76 = por %p74, %p75
    %p77 = scmp.ne.s32.totalorder %s68, %s69
    %p78 = scmp.eq.s32.totalorder %s16, 0
    %p79 = por %p77, %p78
    %p80 = scmp.ne.s32.totalorder %s68, %s69
    %p81 = scmp.eq.s32.totalorder %s17, 3
    %p82 = por %p80, %p81
    %p84 = scmp.ne.s32.totalorder %s69, %s83
    %p85 = scmp.eq.s32.totalorder %s17, 0
    %p86 = por %p84, %p85
    %s88 = sadd.s32 %s87, 1
    %p91 = scmp.eq.s32.totalorder %s11, 3
    %p92 = scmp.ne.s32.totalorder %s87, %s89
    %p93 = scmp.eq.s32.totalorder %s11, 0
    %p94 = por %p92, %p93
    %p95 = scmp.ne.s32.totalorder %s87, %s89
    %p96 = scmp.eq.s32.totalorder %s16, 3
    %p97 = por %p95, %p96
    %p98 = scmp.ne.s32.totalorder %s89, %s90
    %p99 = scmp.eq.s32.totalorder %s16, 0
    %p100 = por %p98, %p99
    %p101 = scmp.ne.s32.totalorder %s89, %s90
    %p102 = scmp.eq.s32.totalorder %s17, 3
    %p103 = por %p101, %p102
    %p105 = scmp.ne.s32.totalorder %s90, %s104
    %p106 = scmp.eq.s32.totalorder %s17, 0
    %p107 = por %p105, %p106
    %s109 = sadd.s32 %s108, 1
    %p112 = scmp.eq.s32.totalorder %s11, 3
    %p113 = scmp.ne.s32.totalorder %s108, %s110
    %p114 = scmp.eq.s32.totalorder %s11, 0
    %p115 = por %p113, %p114
    %p116 = scmp.ne.s32.totalorder %s108, %s110
    %p117 = scmp.eq.s32.totalorder %s16, 3
    %p118 = por %p116, %p117
    %p119 = scmp.ne.s32.totalorder %s110, %s111
    %p120 = scmp.eq.s32.totalorder %s16, 0
    %p121 = por %p119, %p120
    %p122 = scmp.ne.s32.totalorder %s110, %s111
    %p123 = scmp.eq.s32.totalorder %s17, 3
    %p124 = por %p122, %p123
    %p126 = scmp.ne.s32.totalorder %s111, %s125
    %p127 = scmp.eq.s32.totalorder %s17, 0
    %p128 = por %p126, %p127
    %s129 = ssub.s32 %s11, %s18
    %p130 = scmp.eq.s32.totalorder %s129, 0
    %s132 = sadd.s32 %s131, 1
    %s133 = scalar_select %p130, %s131, %s132
    %p136 = pneg %p130
    %p137 = scmp.eq.s32.totalorder %s11, 3
    %p138 = por %p136, %p137
    %p139 = scmp.ne.s32.totalorder %s131, %s134
    %p140 = scmp.eq.s32.totalorder %s11, 0
    %p141 = por %p139, %p140
    %p142 = scmp.ne.s32.totalorder %s131, %s134
    %p143 = scmp.eq.s32.totalorder %s16, 3
    %p144 = por %p142, %p143
    %p145 = scmp.ne.s32.totalorder %s134, %s135
    %p146 = scmp.eq.s32.totalorder %s16, 0
    %p147 = por %p145, %p146
    %p148 = scmp.ne.s32.totalorder %s134, %s135
    %p149 = scmp.eq.s32.totalorder %s17, 3
    %p150 = por %p148, %p149
    %p152 = scmp.ne.s32.totalorder %s135, %s151
    %p153 = scmp.eq.s32.totalorder %s17, 0
    %p154 = por %p152, %p153
    %p155 = scmp.le.s32.totalorder 1, %s11
    %p156 = scmp.lt.s32.totalorder %s11, 5
    %p157 = pnand %p155, %p156
    %p158 = pneg %p157
    // Predicated region
    $region9: #{se_layer.1} parent=5 // pred_check
      _
    $region10: #{se_layer.1} parent=5 // pred_check_branch
      %160 = sbr.rel (%p157) target = $region12
    $region11: #{se_layer.1} parent=5 // pred_region
      %s161 = ssub.s32 %s11, 1
      // Predicated region
      $region13: #{se_layer.1} parent=11 // pred_check
        %p162 = pneg %p58
      $region14: #{se_layer.1} parent=11 // pred_check_branch
        %164 = sbr.rel (%p162) target = $region16
      $region15: #{se_layer.1} parent=11 // pred_region
        _
      $region16: #{se_layer.1} parent=11 // pred_fallthru
        _
      // Predicated region
      $region17: #{se_layer.1} parent=11 // pred_check
        %p165 = pneg %p79
      $region18: #{se_layer.1} parent=11 // pred_check_branch
        %167 = sbr.rel (%p165) target = $region20
      $region19: #{se_layer.1} parent=11 // pred_region
        _
      $region20: #{se_layer.1} parent=11 // pred_fallthru
        _
      // Predicated region
      $region21: #{se_layer.1} parent=11 // pred_check
        %p168 = pneg %p100
      $region22: #{se_layer.1} parent=11 // pred_check_branch
        %170 = sbr.rel (%p168) target = $region24
      $region23: #{se_layer.1} parent=11 // pred_region
        _
      $region24: #{se_layer.1} parent=11 // pred_fallthru
        _
      // Predicated region
      $region25: #{se_layer.1} parent=11 // pred_check
        %p171 = pneg %p121
      $region26: #{se_layer.1} parent=11 // pred_check_branch
        %173 = sbr.rel (%p171) target = $region28
      $region27: #{se_layer.1} parent=11 // pred_region
        _
      $region28: #{se_layer.1} parent=11 // pred_fallthru
        _
    $region12: #{se_layer.1} parent=5 // pred_fallthru
      _
    %p174 = scmp.lt.s32.totalorder %s11, 4
    // Predicated region
    $region29: #{se_layer.1} parent=5 // pred_check
      %p175 = pneg %p174
    $region30: #{se_layer.1} parent=5 // pred_check_branch
      %177 = sbr.rel (%p175) target = $region32
    $region31: #{se_layer.1} parent=5 // pred_region
      // Predicated region
      $region33: #{se_layer.1} parent=31 // pred_check
        %p178 = pneg %p31
      $region34: #{se_layer.1} parent=31 // pred_check_branch
        %180 = sbr.rel (%p178) target = $region36
      $region35: #{se_layer.1} parent=31 // pred_region
        %p181 = scmp.lt.s32.totalorder %s11, 3
        %s182 = scalar_select %p181, %s11, 3
        %s183 = smul.addr %s182, 4
        %s184 = smul.addr %s183, 8
        %s185 = scalar_lea.vmem %s0, %s184
      $region36: #{se_layer.1} parent=31 // pred_fallthru
        _
    $region32: #{se_layer.1} parent=5 // pred_fallthru
      _
    %p186 = scmp.le.s32.totalorder 1, %s11
    %p187 = scmp.lt.s32.totalorder %s11, 5
    %p188 = pnand %p186, %p187
    %p189 = pneg %p188
    // Predicated region
    $region37: #{se_layer.1} parent=5 // pred_check
      _
    $region38: #{se_layer.1} parent=5 // pred_check_branch
      %191 = sbr.rel (%p188) target = $region40
    $region39: #{se_layer.1} parent=5 // pred_region
      %s192 = ssub.s32 %s11, 1
      %p193 = scmp.lt.s32.totalorder %s16, 3
      %s194 = scalar_select %p193, %s16, 3
      %s195 = smul.addr %s194, 4
      %s196 = smul.addr %s195, 8
      %s197 = scalar_lea.vmem %s0, %s196
      %p198 = pneg %p37
      %p199 = pneg %p34
      %p200 = pneg %p58
      %p201 = pneg %p55
      %p202 = pneg %p79
      %p203 = pneg %p76
      %p204 = pneg %p100
      %p205 = pneg %p97
      %p206 = pneg %p121
      %p207 = pneg %p118
      %p208 = pneg %p147
      %p209 = pneg %p144
      %p210 = scmp.lt.s32.totalorder %s16, 3
      %s211 = scalar_select %p210, %s16, 3
      %s212 = smul.addr %s211, 4
      %s213 = smul.addr %s212, 8
      %s214 = scalar_lea.vmem %s5, %s213
      %p215 = scmp.lt.s32.totalorder %s16, 3
      %s216 = scalar_select %p215, %s16, 3
      %s217 = smul.addr %s216, 4
      %s218 = smul.addr %s217, 8
      %s219 = scalar_lea.vmem %s0, %s218
      %p220 = scmp.lt.s32.totalorder %s16, 3
      %s221 = scalar_select %p220, %s16, 3
      %s222 = smul.addr %s221, 4
      %s223 = smul.addr %s222, 8
      %s224 = scalar_lea.vmem %s5, %s223
      %v225 = vld [vmem:[%s219] sm:$0xff]
      %v226 = vld [vmem:[%s219 + $0x8] sm:$0xff]
      %v227 = vld [vmem:[%s219 + $0x10] sm:$0xff]
      %v228 = vld [vmem:[%s219 + $0x18] sm:$0xff]
      %v229 = vadd.f32 %v225, %v226
      %230 = vadd.xlane.f32.xlu0 %v229
      %v231 = vpop.xlane.xlu0 %230
      %v232 = vadd.f32 %v227, %v228
      %233 = vadd.xlane.f32.xlu0 %v232
      %v234 = vpop.xlane.xlu0 %233
      %v235 = vmul.f32 %v231, 0.00390625
      %v236 = vmul.f32 %v234, 0.00390625
      %v237 = vld [vmem:[%s1] sm:$0xff]
      %v238 = vld [vmem:[%s2] sm:$0x1]
      %v241 = vlaneseq
      %v242 = vand.u32 %v241, 127
      %v243 = vlaneseq
      %v244 = vshrl.u32 %v243, 7
      %v245 = vsub.s32 %v242, %v244
      %v246 = vrot.slane %v235, %v245
      %v247 = vadd.s32 %v242, 4294967288
      %v248 = vlaneseq
      %v249 = vshrl.u32 %v248, 7
      %v250 = vsub.s32 %v247, %v249
      %v251 = vrot.slane %v236, %v250
      %vm252 = vcmask 130112
      %v253 = vsel %vm252, %v251, %v246
      %vm254 = vcmask 130048
      %v255 = vsel %vm254, %v253, 0
      %v258 = vsel %vm254, %v237, 0
      %260 = vmatprep.subr.mxu0 0.0
      %v261 = vand.u32 %v258, 4294901760
      %262 = vmatpush1.xpose.msra.mxu0 %v261
      %263 = vmatprep.subr.mxu0 0.0
      %264 = vmatpush1.xpose.msra.mxu0 0.0
      %265 = vmatprep.subr.mxu0 0.0
      %266 = vmatpush1.xpose.msra.mxu0 0.0
      %267 = vmatprep.subr.mxu0 0.0
      %268 = vmatpush1.xpose.msra.mxu0 0.0
      %269 = vmatprep.subr.mxu0 0.0
      %270 = vmatpush1.xpose.msra.mxu0 0.0
      %271 = vmatprep.subr.mxu0 0.0
      %272 = vmatpush1.xpose.msra.mxu0 0.0
      %273 = vmatprep.subr.mxu0 0.0
      %274 = vmatpush1.xpose.msra.mxu0 0.0
      %275 = vmatprep.subr.mxu0 0.0
      %276 = vmatpush1.xpose.msra.mxu0 0.0
      %277 = vmatprep.subr.mxu0 0.0
      %278 = vmatpush1.xpose.msra.mxu0 0.0
      %279 = vmatprep.subr.mxu0 0.0
      %280 = vmatpush1.xpose.msra.mxu0 0.0
      %281 = vmatprep.subr.mxu0 0.0
      %282 = vmatpush1.xpose.msra.mxu0 0.0
      %283 = vmatprep.subr.mxu0 0.0
      %284 = vmatpush1.xpose.msra.mxu0 0.0
      %285 = vmatprep.subr.mxu0 0.0
      %286 = vmatpush1.xpose.msra.mxu0 0.0
      %287 = vmatprep.subr.mxu0 0.0
      %288 = vmatpush1.xpose.msra.mxu0 0.0
      %289 = vmatprep.subr.mxu0 0.0
      %290 = vmatpush1.xpose.msra.mxu0 0.0
      %291 = vmatprep.subr.mxu0 0.0
      %292 = vmatpush1.xpose.msra.mxu0 0.0
      %293 = vmatprep.subr.mxu0 0.0
      %294 = vmatpush1.xpose.msra.mxu0 0.0
      %295 = vmatprep.subr.mxu0 0.0
      %296 = vmatpush1.xpose.msra.mxu0 0.0
      %297 = vmatprep.subr.mxu0 0.0
      %298 = vmatpush1.xpose.msra.mxu0 0.0
      %299 = vmatprep.subr.mxu0 0.0
      %300 = vmatpush1.xpose.msra.mxu0 0.0
      %301 = vmatprep.subr.mxu0 0.0
      %302 = vmatpush1.xpose.msra.mxu0 0.0
      %303 = vmatprep.subr.mxu0 0.0
      %304 = vmatpush1.xpose.msra.mxu0 0.0
      %305 = vmatprep.subr.mxu0 0.0
      %306 = vmatpush1.xpose.msra.mxu0 0.0
      %307 = vmatprep.subr.mxu0 0.0
      %308 = vmatpush1.xpose.msra.mxu0 0.0
      %309 = vmatprep.subr.mxu0 0.0
      %310 = vmatpush1.xpose.msra.mxu0 0.0
      %311 = vmatprep.subr.mxu0 0.0
      %312 = vmatpush1.xpose.msra.mxu0 0.0
      %313 = vmatprep.subr.mxu0 0.0
      %314 = vmatpush1.xpose.msra.mxu0 0.0
      %315 = vmatprep.subr.mxu0 0.0
      %316 = vmatpush1.xpose.msra.mxu0 0.0
      %317 = vmatprep.subr.mxu0 0.0
      %318 = vmatpush1.xpose.msra.mxu0 0.0
      %319 = vmatprep.subr.mxu0 0.0
      %320 = vmatpush1.xpose.msra.mxu0 0.0
      %321 = vmatprep.subr.mxu0 0.0
      %322 = vmatpush1.xpose.msra.mxu0 0.0
      %323 = vmatprep.subr.mxu0 0.0
      %324 = vmatpush1.xpose.msra.mxu0 0.0
      %325 = vmatprep.mubr.f32.mxu0 0.0
      %v326 = vand.u32 %v255, 4294901760
      %v327 = vsub.f32 %v255, %v326
      %v328 = vand.u32 %v327, 4294901760
      %v329 = vsub.f32 %v327, %v328
      %v330 = vand.u32 %v329, 4294901760
      %331 = vmatmul.mubr.f32.gmra.mrb[0].mxu0 %v330
      %v332 = vpop.f32.mrb[0].mxu0
      %v333 = vadd.f32 %v238, %v332
      %v334 = vpop.f32.mrb[0].mxu0
      %335 = vdwg.mxu0
      %336 = vmatprep.subr.mxu0 0.0
      %v337 = vand.u32 %v258, 4294901760
      %v338 = vsub.f32 %v258, %v337
      %v339 = vand.u32 %v338, 4294901760
      %v340 = vsub.f32 %v338, %v339
      %v341 = vand.u32 %v340, 4294901760
      %342 = vmatpush1.xpose.msra.mxu0 %v341
      %343 = vmatprep.subr.mxu0 0.0
      %344 = vmatpush1.xpose.msra.mxu0 0.0
      %345 = vmatprep.subr.mxu0 0.0
      %346 = vmatpush1.xpose.msra.mxu0 0.0
      %347 = vmatprep.subr.mxu0 0.0
      %348 = vmatpush1.xpose.msra.mxu0 0.0
      %349 = vmatprep.subr.mxu0 0.0
      %350 = vmatpush1.xpose.msra.mxu0 0.0
      %351 = vmatprep.subr.mxu0 0.0
      %352 = vmatpush1.xpose.msra.mxu0 0.0
      %353 = vmatprep.subr.mxu0 0.0
      %354 = vmatpush1.xpose.msra.mxu0 0.0
      %355 = vmatprep.subr.mxu0 0.0
      %356 = vmatpush1.xpose.msra.mxu0 0.0
      %357 = vmatprep.subr.mxu0 0.0
      %358 = vmatpush1.xpose.msra.mxu0 0.0
      %359 = vmatprep.subr.mxu0 0.0
      %360 = vmatpush1.xpose.msra.mxu0 0.0
      %361 = vmatprep.subr.mxu0 0.0
      %362 = vmatpush1.xpose.msra.mxu0 0.0
      %363 = vmatprep.subr.mxu0 0.0
      %364 = vmatpush1.xpose.msra.mxu0 0.0
      %365 = vmatprep.subr.mxu0 0.0
      %366 = vmatpush1.xpose.msra.mxu0 0.0
      %367 = vmatprep.subr.mxu0 0.0
      %368 = vmatpush1.xpose.msra.mxu0 0.0
      %369 = vmatprep.subr.mxu0 0.0
      %370 = vmatpush1.xpose.msra.mxu0 0.0
      %371 = vmatprep.subr.mxu0 0.0
      %372 = vmatpush1.xpose.msra.mxu0 0.0
      %373 = vmatprep.subr.mxu0 0.0
      %374 = vmatpush1.xpose.msra.mxu0 0.0
      %375 = vmatprep.subr.mxu0 0.0
      %376 = vmatpush1.xpose.msra.mxu0 0.0
      %377 = vmatprep.subr.mxu0 0.0
      %378 = vmatpush1.xpose.msra.mxu0 0.0
      %379 = vmatprep.subr.mxu0 0.0
      %380 = vmatpush1.xpose.msra.mxu0 0.0
      %381 = vmatprep.subr.mxu0 0.0
      %382 = vmatpush1.xpose.msra.mxu0 0.0
      %383 = vmatprep.subr.mxu0 0.0
      %384 = vmatpush1.xpose.msra.mxu0 0.0
      %385 = vmatprep.subr.mxu0 0.0
      %386 = vmatpush1.xpose.msra.mxu0 0.0
      %387 = vmatprep.subr.mxu0 0.0
      %388 = vmatpush1.xpose.msra.mxu0 0.0
      %389 = vmatprep.subr.mxu0 0.0
      %390 = vmatpush1.xpose.msra.mxu0 0.0
      %391 = vmatprep.subr.mxu0 0.0
      %392 = vmatpush1.xpose.msra.mxu0 0.0
      %393 = vmatprep.subr.mxu0 0.0
      %394 = vmatpush1.xpose.msra.mxu0 0.0
      %395 = vmatprep.subr.mxu0 0.0
      %396 = vmatpush1.xpose.msra.mxu0 0.0
      %397 = vmatprep.subr.mxu0 0.0
      %398 = vmatpush1.xpose.msra.mxu0 0.0
      %399 = vmatprep.subr.mxu0 0.0
      %400 = vmatpush1.xpose.msra.mxu0 0.0
      %401 = vmatprep.subr.mxu0 0.0
      %402 = vmatpush1.xpose.msra.mxu0 0.0
      %403 = vmatprep.subr.mxu0 0.0
      %404 = vmatpush1.xpose.msra.mxu0 0.0
      %405 = vmatprep.mubr.f32.mxu0 0.0
      %v406 = vand.u32 %v255, 4294901760
      %407 = vmatmul.mubr.f32.gmra.mrb[0].mxu0 %v406
      %v408 = vpop.f32.mrb[0].mxu0
      %v409 = vadd.f32 %v333, %v408
      %v410 = vpop.f32.mrb[0].mxu0
      %411 = vdwg.mxu0
      %412 = vmatprep.subr.mxu0 0.0
      %v413 = vand.u32 %v258, 4294901760
      %v414 = vsub.f32 %v258, %v413
      %415 = vmatpush1.xpose.msra.mxu0 %v414
      %416 = vmatprep.subr.mxu0 0.0
      %417 = vmatpush1.xpose.msra.mxu0 0.0
      %418 = vmatprep.subr.mxu0 0.0
      %419 = vmatpush1.xpose.msra.mxu0 0.0
      %420 = vmatprep.subr.mxu0 0.0
      %421 = vmatpush1.xpose.msra.mxu0 0.0
      %422 = vmatprep.subr.mxu0 0.0
      %423 = vmatpush1.xpose.msra.mxu0 0.0
      %424 = vmatprep.subr.mxu0 0.0
      %425 = vmatpush1.xpose.msra.mxu0 0.0
      %426 = vmatprep.subr.mxu0 0.0
      %427 = vmatpush1.xpose.msra.mxu0 0.0
      %428 = vmatprep.subr.mxu0 0.0
      %429 = vmatpush1.xpose.msra.mxu0 0.0
      %430 = vmatprep.subr.mxu0 0.0
      %431 = vmatpush1.xpose.msra.mxu0 0.0
      %432 = vmatprep.subr.mxu0 0.0
      %433 = vmatpush1.xpose.msra.mxu0 0.0
      %434 = vmatprep.subr.mxu0 0.0
      %435 = vmatpush1.xpose.msra.mxu0 0.0
      %436 = vmatprep.subr.mxu0 0.0
      %437 = vmatpush1.xpose.msra.mxu0 0.0
      %438 = vmatprep.subr.mxu0 0.0
      %439 = vmatpush1.xpose.msra.mxu0 0.0
      %440 = vmatprep.subr.mxu0 0.0
      %441 = vmatpush1.xpose.msra.mxu0 0.0
      %442 = vmatprep.subr.mxu0 0.0
      %443 = vmatpush1.xpose.msra.mxu0 0.0
      %444 = vmatprep.subr.mxu0 0.0
      %445 = vmatpush1.xpose.msra.mxu0 0.0
      %446 = vmatprep.subr.mxu0 0.0
      %447 = vmatpush1.xpose.msra.mxu0 0.0
      %448 = vmatprep.subr.mxu0 0.0
      %449 = vmatpush1.xpose.msra.mxu0 0.0
      %450 = vmatprep.subr.mxu0 0.0
      %451 = vmatpush1.xpose.msra.mxu0 0.0
      %452 = vmatprep.subr.mxu0 0.0
      %453 = vmatpush1.xpose.msra.mxu0 0.0
      %454 = vmatprep.subr.mxu0 0.0
      %455 = vmatpush1.xpose.msra.mxu0 0.0
      %456 = vmatprep.subr.mxu0 0.0
      %457 = vmatpush1.xpose.msra.mxu0 0.0
      %458 = vmatprep.subr.mxu0 0.0
      %459 = vmatpush1.xpose.msra.mxu0 0.0
      %460 = vmatprep.subr.mxu0 0.0
      %461 = vmatpush1.xpose.msra.mxu0 0.0
      %462 = vmatprep.subr.mxu0 0.0
      %463 = vmatpush1.xpose.msra.mxu0 0.0
      %464 = vmatprep.subr.mxu0 0.0
      %465 = vmatpush1.xpose.msra.mxu0 0.0
      %466 = vmatprep.subr.mxu0 0.0
      %467 = vmatpush1.xpose.msra.mxu0 0.0
      %468 = vmatprep.subr.mxu0 0.0
      %469 = vmatpush1.xpose.msra.mxu0 0.0
      %470 = vmatprep.subr.mxu0 0.0
      %471 = vmatpush1.xpose.msra.mxu0 0.0
      %472 = vmatprep.subr.mxu0 0.0
      %473 = vmatpush1.xpose.msra.mxu0 0.0
      %474 = vmatprep.subr.mxu0 0.0
      %475 = vmatpush1.xpose.msra.mxu0 0.0
      %476 = vmatprep.subr.mxu0 0.0
      %477 = vmatpush1.xpose.msra.mxu0 0.0
      %478 = vmatprep.mubr.f32.mxu0 0.0
      %v479 = vand.u32 %v255, 4294901760
      %v480 = vsub.f32 %v255, %v479
      %481 = vmatmul.mubr.f32.gmra.mrb[0].mxu0 %v480
      %v482 = vpop.f32.mrb[0].mxu0
      %v483 = vadd.f32 %v409, %v482
      %v484 = vpop.f32.mrb[0].mxu0
      %485 = vdwg.mxu0
      %486 = vmatprep.subr.mxu0 0.0
      %v487 = vand.u32 %v258, 4294901760
      %488 = vmatpush1.xpose.msra.mxu0 %v487
      %489 = vmatprep.subr.mxu0 0.0
      %490 = vmatpush1.xpose.msra.mxu0 0.0
      %491 = vmatprep.subr.mxu0 0.0
      %492 = vmatpush1.xpose.msra.mxu0 0.0
      %493 = vmatprep.subr.mxu0 0.0
      %494 = vmatpush1.xpose.msra.mxu0 0.0
      %495 = vmatprep.subr.mxu0 0.0
      %496 = vmatpush1.xpose.msra.mxu0 0.0
      %497 = vmatprep.subr.mxu0 0.0
      %498 = vmatpush1.xpose.msra.mxu0 0.0
      %499 = vmatprep.subr.mxu0 0.0
      %500 = vmatpush1.xpose.msra.mxu0 0.0
      %501 = vmatprep.subr.mxu0 0.0
      %502 = vmatpush1.xpose.msra.mxu0 0.0
      %503 = vmatprep.subr.mxu0 0.0
      %504 = vmatpush1.xpose.msra.mxu0 0.0
      %505 = vmatprep.subr.mxu0 0.0
      %506 = vmatpush1.xpose.msra.mxu0 0.0
      %507 = vmatprep.subr.mxu0 0.0
      %508 = vmatpush1.xpose.msra.mxu0 0.0
      %509 = vmatprep.subr.mxu0 0.0
      %510 = vmatpush1.xpose.msra.mxu0 0.0
      %511 = vmatprep.subr.mxu0 0.0
      %512 = vmatpush1.xpose.msra.mxu0 0.0
      %513 = vmatprep.subr.mxu0 0.0
      %514 = vmatpush1.xpose.msra.mxu0 0.0
      %515 = vmatprep.subr.mxu0 0.0
      %516 = vmatpush1.xpose.msra.mxu0 0.0
      %517 = vmatprep.subr.mxu0 0.0
      %518 = vmatpush1.xpose.msra.mxu0 0.0
      %519 = vmatprep.subr.mxu0 0.0
      %520 = vmatpush1.xpose.msra.mxu0 0.0
      %521 = vmatprep.subr.mxu0 0.0
      %522 = vmatpush1.xpose.msra.mxu0 0.0
      %523 = vmatprep.subr.mxu0 0.0
      %524 = vmatpush1.xpose.msra.mxu0 0.0
      %525 = vmatprep.subr.mxu0 0.0
      %526 = vmatpush1.xpose.msra.mxu0 0.0
      %527 = vmatprep.subr.mxu0 0.0
      %528 = vmatpush1.xpose.msra.mxu0 0.0
      %529 = vmatprep.subr.mxu0 0.0
      %530 = vmatpush1.xpose.msra.mxu0 0.0
      %531 = vmatprep.subr.mxu0 0.0
      %532 = vmatpush1.xpose.msra.mxu0 0.0
      %533 = vmatprep.subr.mxu0 0.0
      %534 = vmatpush1.xpose.msra.mxu0 0.0
      %535 = vmatprep.subr.mxu0 0.0
      %536 = vmatpush1.xpose.msra.mxu0 0.0
      %537 = vmatprep.subr.mxu0 0.0
      %538 = vmatpush1.xpose.msra.mxu0 0.0
      %539 = vmatprep.subr.mxu0 0.0
      %540 = vmatpush1.xpose.msra.mxu0 0.0
      %541 = vmatprep.subr.mxu0 0.0
      %542 = vmatpush1.xpose.msra.mxu0 0.0
      %543 = vmatprep.subr.mxu0 0.0
      %544 = vmatpush1.xpose.msra.mxu0 0.0
      %545 = vmatprep.subr.mxu0 0.0
      %546 = vmatpush1.xpose.msra.mxu0 0.0
      %547 = vmatprep.subr.mxu0 0.0
      %548 = vmatpush1.xpose.msra.mxu0 0.0
      %549 = vmatprep.subr.mxu0 0.0
      %550 = vmatpush1.xpose.msra.mxu0 0.0
      %551 = vmatprep.mubr.f32.mxu0 0.0
      %v552 = vand.u32 %v255, 4294901760
      %v553 = vsub.f32 %v255, %v552
      %v554 = vand.u32 %v553, 4294901760
      %555 = vmatmul.mubr.f32.gmra.mrb[0].mxu0 %v554
      %v556 = vpop.f32.mrb[0].mxu0
      %v557 = vadd.f32 %v483, %v556
      %v558 = vpop.f32.mrb[0].mxu0
      %559 = vdwg.mxu0
      %560 = vmatprep.subr.mxu0 0.0
      %v561 = vand.u32 %v258, 4294901760
      %v562 = vsub.f32 %v258, %v561
      %v563 = vand.u32 %v562, 4294901760
      %564 = vmatpush1.xpose.msra.mxu0 %v563
      %565 = vmatprep.subr.mxu0 0.0
      %566 = vmatpush1.xpose.msra.mxu0 0.0
      %567 = vmatprep.subr.mxu0 0.0
      %568 = vmatpush1.xpose.msra.mxu0 0.0
      %569 = vmatprep.subr.mxu0 0.0
      %570 = vmatpush1.xpose.msra.mxu0 0.0
      %571 = vmatprep.subr.mxu0 0.0
      %572 = vmatpush1.xpose.msra.mxu0 0.0
      %573 = vmatprep.subr.mxu0 0.0
      %574 = vmatpush1.xpose.msra.mxu0 0.0
      %575 = vmatprep.subr.mxu0 0.0
      %576 = vmatpush1.xpose.msra.mxu0 0.0
      %577 = vmatprep.subr.mxu0 0.0
      %578 = vmatpush1.xpose.msra.mxu0 0.0
      %579 = vmatprep.subr.mxu0 0.0
      %580 = vmatpush1.xpose.msra.mxu0 0.0
      %581 = vmatprep.subr.mxu0 0.0
      %582 = vmatpush1.xpose.msra.mxu0 0.0
      %583 = vmatprep.subr.mxu0 0.0
      %584 = vmatpush1.xpose.msra.mxu0 0.0
      %585 = vmatprep.subr.mxu0 0.0
      %586 = vmatpush1.xpose.msra.mxu0 0.0
      %587 = vmatprep.subr.mxu0 0.0
      %588 = vmatpush1.xpose.msra.mxu0 0.0
      %589 = vmatprep.subr.mxu0 0.0
      %590 = vmatpush1.xpose.msra.mxu0 0.0
      %591 = vmatprep.subr.mxu0 0.0
      %592 = vmatpush1.xpose.msra.mxu0 0.0
      %593 = vmatprep.subr.mxu0 0.0
      %594 = vmatpush1.xpose.msra.mxu0 0.0
      %595 = vmatprep.subr.mxu0 0.0
      %596 = vmatpush1.xpose.msra.mxu0 0.0
      %597 = vmatprep.subr.mxu0 0.0
      %598 = vmatpush1.xpose.msra.mxu0 0.0
      %599 = vmatprep.subr.mxu0 0.0
      %600 = vmatpush1.xpose.msra.mxu0 0.0
      %601 = vmatprep.subr.mxu0 0.0
      %602 = vmatpush1.xpose.msra.mxu0 0.0
      %603 = vmatprep.subr.mxu0 0.0
      %604 = vmatpush1.xpose.msra.mxu0 0.0
      %605 = vmatprep.subr.mxu0 0.0
      %606 = vmatpush1.xpose.msra.mxu0 0.0
      %607 = vmatprep.subr.mxu0 0.0
      %608 = vmatpush1.xpose.msra.mxu0 0.0
      %609 = vmatprep.subr.mxu0 0.0
      %610 = vmatpush1.xpose.msra.mxu0 0.0
      %611 = vmatprep.subr.mxu0 0.0
      %612 = vmatpush1.xpose.msra.mxu0 0.0
      %613 = vmatprep.subr.mxu0 0.0
      %614 = vmatpush1.xpose.msra.mxu0 0.0
      %615 = vmatprep.subr.mxu0 0.0
      %616 = vmatpush1.xpose.msra.mxu0 0.0
      %617 = vmatprep.subr.mxu0 0.0
      %618 = vmatpush1.xpose.msra.mxu0 0.0
      %619 = vmatprep.subr.mxu0 0.0
      %620 = vmatpush1.xpose.msra.mxu0 0.0
      %621 = vmatprep.subr.mxu0 0.0
      %622 = vmatpush1.xpose.msra.mxu0 0.0
      %623 = vmatprep.subr.mxu0 0.0
      %624 = vmatpush1.xpose.msra.mxu0 0.0
      %625 = vmatprep.subr.mxu0 0.0
      %626 = vmatpush1.xpose.msra.mxu0 0.0
      %627 = vmatprep.mubr.f32.mxu0 0.0
      %v628 = vand.u32 %v255, 4294901760
      %629 = vmatmul.mubr.f32.gmra.mrb[0].mxu0 %v628
      %v630 = vpop.f32.mrb[0].mxu0
      %v631 = vadd.f32 %v557, %v630
      %v632 = vpop.f32.mrb[0].mxu0
      %633 = vdwg.mxu0
      %634 = vmatprep.subr.mxu0 0.0
      %v635 = vand.u32 %v258, 4294901760
      %636 = vmatpush1.xpose.msra.mxu0 %v635
      %637 = vmatprep.subr.mxu0 0.0
      %638 = vmatpush1.xpose.msra.mxu0 0.0
      %639 = vmatprep.subr.mxu0 0.0
      %640 = vmatpush1.xpose.msra.mxu0 0.0
      %641 = vmatprep.subr.mxu0 0.0
      %642 = vmatpush1.xpose.msra.mxu0 0.0
      %643 = vmatprep.subr.mxu0 0.0
      %644 = vmatpush1.xpose.msra.mxu0 0.0
      %645 = vmatprep.subr.mxu0 0.0
      %646 = vmatpush1.xpose.msra.mxu0 0.0
      %647 = vmatprep.subr.mxu0 0.0
      %648 = vmatpush1.xpose.msra.mxu0 0.0
      %649 = vmatprep.subr.mxu0 0.0
      %650 = vmatpush1.xpose.msra.mxu0 0.0
      %651 = vmatprep.subr.mxu0 0.0
      %652 = vmatpush1.xpose.msra.mxu0 0.0
      %653 = vmatprep.subr.mxu0 0.0
      %654 = vmatpush1.xpose.msra.mxu0 0.0
      %655 = vmatprep.subr.mxu0 0.0
      %656 = vmatpush1.xpose.msra.mxu0 0.0
      %657 = vmatprep.subr.mxu0 0.0
      %658 = vmatpush1.xpose.msra.mxu0 0.0
      %659 = vmatprep.subr.mxu0 0.0
      %660 = vmatpush1.xpose.msra.mxu0 0.0
      %661 = vmatprep.subr.mxu0 0.0
      %662 = vmatpush1.xpose.msra.mxu0 0.0
      %663 = vmatprep.subr.mxu0 0.0
      %664 = vmatpush1.xpose.msra.mxu0 0.0
      %665 = vmatprep.subr.mxu0 0.0
      %666 = vmatpush1.xpose.msra.mxu0 0.0
      %667 = vmatprep.subr.mxu0 0.0
      %668 = vmatpush1.xpose.msra.mxu0 0.0
      %669 = vmatprep.subr.mxu0 0.0
      %670 = vmatpush1.xpose.msra.mxu0 0.0
      %671 = vmatprep.subr.mxu0 0.0
      %672 = vmatpush1.xpose.msra.mxu0 0.0
      %673 = vmatprep.subr.mxu0 0.0
      %674 = vmatpush1.xpose.msra.mxu0 0.0
      %675 = vmatprep.subr.mxu0 0.0
      %676 = vmatpush1.xpose.msra.mxu0 0.0
      %677 = vmatprep.subr.mxu0 0.0
      %678 = vmatpush1.xpose.msra.mxu0 0.0
      %679 = vmatprep.subr.mxu0 0.0
      %680 = vmatpush1.xpose.msra.mxu0 0.0
      %681 = vmatprep.subr.mxu0 0.0
      %682 = vmatpush1.xpose.msra.mxu0 0.0
      %683 = vmatprep.subr.mxu0 0.0
      %684 = vmatpush1.xpose.msra.mxu0 0.0
      %685 = vmatprep.subr.mxu0 0.0
      %686 = vmatpush1.xpose.msra.mxu0 0.0
      %687 = vmatprep.subr.mxu0 0.0
      %688 = vmatpush1.xpose.msra.mxu0 0.0
      %689 = vmatprep.subr.mxu0 0.0
      %690 = vmatpush1.xpose.msra.mxu0 0.0
      %691 = vmatprep.subr.mxu0 0.0
      %692 = vmatpush1.xpose.msra.mxu0 0.0
      %693 = vmatprep.subr.mxu0 0.0
      %694 = vmatpush1.xpose.msra.mxu0 0.0
      %695 = vmatprep.subr.mxu0 0.0
      %696 = vmatpush1.xpose.msra.mxu0 0.0
      %697 = vmatprep.subr.mxu0 0.0
      %698 = vmatpush1.xpose.msra.mxu0 0.0
      %699 = vmatprep.mubr.f32.mxu0 0.0
      %v700 = vand.u32 %v255, 4294901760
      %701 = vmatmul.mubr.f32.gmra.mrb[0].mxu0 %v700
      %v702 = vpop.f32.mrb[0].mxu0
      %v703 = vadd.f32 %v631, %v702
      %v704 = vpop.f32.mrb[0].mxu0
      %705 = vdwg.mxu0
      %v706 = vmax.f32 %v703, 0.0
      %v707 = vld [vmem:[%s3] sm:$0xff]
      %v708 = vld [vmem:[%s4] sm:$0x1]
      %vm709 = vcmask 64512
      %v711 = vsel %vm709, %v706, 0
      %713 = vmatprep.subr.mxu0 0.0
      %v714 = vand.u32 %v707, 4294901760
      %715 = vmatpush1.msra.mxu0 %v714
      %716 = vmatprep.subr.mxu0 0.0
      %717 = vmatpush1.msra.mxu0 0.0
      %718 = vmatprep.subr.mxu0 0.0
      %719 = vmatpush1.msra.mxu0 0.0
      %720 = vmatprep.subr.mxu0 0.0
      %721 = vmatpush1.msra.mxu0 0.0
      %722 = vmatprep.subr.mxu0 0.0
      %723 = vmatpush1.msra.mxu0 0.0
      %724 = vmatprep.subr.mxu0 0.0
      %725 = vmatpush1.msra.mxu0 0.0
      %726 = vmatprep.subr.mxu0 0.0
      %727 = vmatpush1.msra.mxu0 0.0
      %728 = vmatprep.subr.mxu0 0.0
      %729 = vmatpush1.msra.mxu0 0.0
      %730 = vmatprep.subr.mxu0 0.0
      %731 = vmatpush1.msra.mxu0 0.0
      %732 = vmatprep.subr.mxu0 0.0
      %733 = vmatpush1.msra.mxu0 0.0
      %734 = vmatprep.subr.mxu0 0.0
      %735 = vmatpush1.msra.mxu0 0.0
      %736 = vmatprep.subr.mxu0 0.0
      %737 = vmatpush1.msra.mxu0 0.0
      %738 = vmatprep.subr.mxu0 0.0
      %739 = vmatpush1.msra.mxu0 0.0
      %740 = vmatprep.subr.mxu0 0.0
      %741 = vmatpush1.msra.mxu0 0.0
      %742 = vmatprep.subr.mxu0 0.0
      %743 = vmatpush1.msra.mxu0 0.0
      %744 = vmatprep.subr.mxu0 0.0
      %745 = vmatpush1.msra.mxu0 0.0
      %746 = vmatprep.subr.mxu0 0.0
      %747 = vmatpush1.msra.mxu0 0.0
      %748 = vmatprep.subr.mxu0 0.0
      %749 = vmatpush1.msra.mxu0 0.0
      %750 = vmatprep.subr.mxu0 0.0
      %751 = vmatpush1.msra.mxu0 0.0
      %752 = vmatprep.subr.mxu0 0.0
      %753 = vmatpush1.msra.mxu0 0.0
      %754 = vmatprep.subr.mxu0 0.0
      %755 = vmatpush1.msra.mxu0 0.0
      %756 = vmatprep.subr.mxu0 0.0
      %757 = vmatpush1.msra.mxu0 0.0
      %758 = vmatprep.subr.mxu0 0.0
      %759 = vmatpush1.msra.mxu0 0.0
      %760 = vmatprep.subr.mxu0 0.0
      %761 = vmatpush1.msra.mxu0 0.0
      %762 = vmatprep.subr.mxu0 0.0
      %763 = vmatpush1.msra.mxu0 0.0
      %764 = vmatprep.subr.mxu0 0.0
      %765 = vmatpush1.msra.mxu0 0.0
      %766 = vmatprep.subr.mxu0 0.0
      %767 = vmatpush1.msra.mxu0 0.0
      %768 = vmatprep.subr.mxu0 0.0
      %769 = vmatpush1.msra.mxu0 0.0
      %770 = vmatprep.subr.mxu0 0.0
      %771 = vmatpush1.msra.mxu0 0.0
      %772 = vmatprep.subr.mxu0 0.0
      %773 = vmatpush1.msra.mxu0 0.0
      %774 = vmatprep.subr.mxu0 0.0
      %775 = vmatpush1.msra.mxu0 0.0
      %776 = vmatprep.subr.mxu0 0.0
      %777 = vmatpush1.msra.mxu0 0.0
      %778 = vmatprep.mubr.f32.mxu0 0.0
      %v779 = vand.u32 %v711, 4294901760
      %v780 = vsub.f32 %v711, %v779
      %v781 = vand.u32 %v780, 4294901760
      %v782 = vsub.f32 %v780, %v781
      %v783 = vand.u32 %v782, 4294901760
      %784 = vmatmul.mubr.f32.gmra.mrb[0].mxu0 %v783
      %v785 = vpop.f32.mrb[0].mxu0
      %v786 = vadd.f32 %v708, %v785
      %v787 = vpop.f32.mrb[0].mxu0
      %788 = vdwg.mxu0
      %789 = vmatprep.subr.mxu0 0.0
      %v790 = vand.u32 %v707, 4294901760
      %v791 = vsub.f32 %v707, %v790
      %v792 = vand.u32 %v791, 4294901760
      %v793 = vsub.f32 %v791, %v792
      %v794 = vand.u32 %v793, 4294901760
      %795 = vmatpush1.msra.mxu0 %v794
      %796 = vmatprep.subr.mxu0 0.0
      %797 = vmatpush1.msra.mxu0 0.0
      %798 = vmatprep.subr.mxu0 0.0
      %799 = vmatpush1.msra.mxu0 0.0
      %800 = vmatprep.subr.mxu0 0.0
      %801 = vmatpush1.msra.mxu0 0.0
      %802 = vmatprep.subr.mxu0 0.0
      %803 = vmatpush1.msra.mxu0 0.0
      %804 = vmatprep.subr.mxu0 0.0
      %805 = vmatpush1.msra.mxu0 0.0
      %806 = vmatprep.subr.mxu0 0.0
      %807 = vmatpush1.msra.mxu0 0.0
      %808 = vmatprep.subr.mxu0 0.0
      %809 = vmatpush1.msra.mxu0 0.0
      %810 = vmatprep.subr.mxu0 0.0
      %811 = vmatpush1.msra.mxu0 0.0
      %812 = vmatprep.subr.mxu0 0.0
      %813 = vmatpush1.msra.mxu0 0.0
      %814 = vmatprep.subr.mxu0 0.0
      %815 = vmatpush1.msra.mxu0 0.0
      %816 = vmatprep.subr.mxu0 0.0
      %817 = vmatpush1.msra.mxu0 0.0
      %818 = vmatprep.subr.mxu0 0.0
      %819 = vmatpush1.msra.mxu0 0.0
      %820 = vmatprep.subr.mxu0 0.0
      %821 = vmatpush1.msra.mxu0 0.0
      %822 = vmatprep.subr.mxu0 0.0
      %823 = vmatpush1.msra.mxu0 0.0
      %824 = vmatprep.subr.mxu0 0.0
      %825 = vmatpush1.msra.mxu0 0.0
      %826 = vmatprep.subr.mxu0 0.0
      %827 = vmatpush1.msra.mxu0 0.0
      %828 = vmatprep.subr.mxu0 0.0
      %829 = vmatpush1.msra.mxu0 0.0
      %830 = vmatprep.subr.mxu0 0.0
      %831 = vmatpush1.msra.mxu0 0.0
      %832 = vmatprep.subr.mxu0 0.0
      %833 = vmatpush1.msra.mxu0 0.0
      %834 = vmatprep.subr.mxu0 0.0
      %835 = vmatpush1.msra.mxu0 0.0
      %836 = vmatprep.subr.mxu0 0.0
      %837 = vmatpush1.msra.mxu0 0.0
      %838 = vmatprep.subr.mxu0 0.0
      %839 = vmatpush1.msra.mxu0 0.0
      %840 = vmatprep.subr.mxu0 0.0
      %841 = vmatpush1.msra.mxu0 0.0
      %842 = vmatprep.subr.mxu0 0.0
      %843 = vmatpush1.msra.mxu0 0.0
      %844 = vmatprep.subr.mxu0 0.0
      %845 = vmatpush1.msra.mxu0 0.0
      %846 = vmatprep.subr.mxu0 0.0
      %847 = vmatpush1.msra.mxu0 0.0
      %848 = vmatprep.subr.mxu0 0.0
      %849 = vmatpush1.msra.mxu0 0.0
      %850 = vmatprep.subr.mxu0 0.0
      %851 = vmatpush1.msra.mxu0 0.0
      %852 = vmatprep.subr.mxu0 0.0
      %853 = vmatpush1.msra.mxu0 0.0
      %854 = vmatprep.subr.mxu0 0.0
      %855 = vmatpush1.msra.mxu0 0.0
      %856 = vmatprep.subr.mxu0 0.0
      %857 = vmatpush1.msra.mxu0 0.0
      %858 = vmatprep.mubr.f32.mxu0 0.0
      %v859 = vand.u32 %v711, 4294901760
      %860 = vmatmul.mubr.f32.gmra.mrb[0].mxu0 %v859
      %v861 = vpop.f32.mrb[0].mxu0
      %v862 = vadd.f32 %v786, %v861
      %v863 = vpop.f32.mrb[0].mxu0
      %864 = vdwg.mxu0
      %865 = vmatprep.subr.mxu0 0.0
      %v866 = vand.u32 %v707, 4294901760
      %v867 = vsub.f32 %v707, %v866
      %868 = vmatpush1.msra.mxu0 %v867
      %869 = vmatprep.subr.mxu0 0.0
      %870 = vmatpush1.msra.mxu0 0.0
      %871 = vmatprep.subr.mxu0 0.0
      %872 = vmatpush1.msra.mxu0 0.0
      %873 = vmatprep.subr.mxu0 0.0
      %874 = vmatpush1.msra.mxu0 0.0
      %875 = vmatprep.subr.mxu0 0.0
      %876 = vmatpush1.msra.mxu0 0.0
      %877 = vmatprep.subr.mxu0 0.0
      %878 = vmatpush1.msra.mxu0 0.0
      %879 = vmatprep.subr.mxu0 0.0
      %880 = vmatpush1.msra.mxu0 0.0
      %881 = vmatprep.subr.mxu0 0.0
      %882 = vmatpush1.msra.mxu0 0.0
      %883 = vmatprep.subr.mxu0 0.0
      %884 = vmatpush1.msra.mxu0 0.0
      %885 = vmatprep.subr.mxu0 0.0
      %886 = vmatpush1.msra.mxu0 0.0
      %887 = vmatprep.subr.mxu0 0.0
      %888 = vmatpush1.msra.mxu0 0.0
      %889 = vmatprep.subr.mxu0 0.0
      %890 = vmatpush1.msra.mxu0 0.0
      %891 = vmatprep.subr.mxu0 0.0
      %892 = vmatpush1.msra.mxu0 0.0
      %893 = vmatprep.subr.mxu0 0.0
      %894 = vmatpush1.msra.mxu0 0.0
      %895 = vmatprep.subr.mxu0 0.0
      %896 = vmatpush1.msra.mxu0 0.0
      %897 = vmatprep.subr.mxu0 0.0
      %898 = vmatpush1.msra.mxu0 0.0
      %899 = vmatprep.subr.mxu0 0.0
      %900 = vmatpush1.msra.mxu0 0.0
      %901 = vmatprep.subr.mxu0 0.0
      %902 = vmatpush1.msra.mxu0 0.0
      %903 = vmatprep.subr.mxu0 0.0
      %904 = vmatpush1.msra.mxu0 0.0
      %905 = vmatprep.subr.mxu0 0.0
      %906 = vmatpush1.msra.mxu0 0.0
      %907 = vmatprep.subr.mxu0 0.0
      %908 = vmatpush1.msra.mxu0 0.0
      %909 = vmatprep.subr.mxu0 0.0
      %910 = vmatpush1.msra.mxu0 0.0
      %911 = vmatprep.subr.mxu0 0.0
      %912 = vmatpush1.msra.mxu0 0.0
      %913 = vmatprep.subr.mxu0 0.0
      %914 = vmatpush1.msra.mxu0 0.0
      %915 = vmatprep.subr.mxu0 0.0
      %916 = vmatpush1.msra.mxu0 0.0
      %917 = vmatprep.subr.mxu0 0.0
      %918 = vmatpush1.msra.mxu0 0.0
      %919 = vmatprep.subr.mxu0 0.0
      %920 = vmatpush1.msra.mxu0 0.0
      %921 = vmatprep.subr.mxu0 0.0
      %922 = vmatpush1.msra.mxu0 0.0
      %923 = vmatprep.subr.mxu0 0.0
      %924 = vmatpush1.msra.mxu0 0.0
      %925 = vmatprep.subr.mxu0 0.0
      %926 = vmatpush1.msra.mxu0 0.0
      %927 = vmatprep.subr.mxu0 0.0
      %928 = vmatpush1.msra.mxu0 0.0
      %929 = vmatprep.subr.mxu0 0.0
      %930 = vmatpush1.msra.mxu0 0.0
      %931 = vmatprep.mubr.f32.mxu0 0.0
      %v932 = vand.u32 %v711, 4294901760
      %v933 = vsub.f32 %v711, %v932
      %934 = vmatmul.mubr.f32.gmra.mrb[0].mxu0 %v933
      %v935 = vpop.f32.mrb[0].mxu0
      %v936 = vadd.f32 %v862, %v935
      %v937 = vpop.f32.mrb[0].mxu0
      %938 = vdwg.mxu0
      %939 = vmatprep.subr.mxu0 0.0
      %v940 = vand.u32 %v707, 4294901760
      %941 = vmatpush1.msra.mxu0 %v940
      %942 = vmatprep.subr.mxu0 0.0
      %943 = vmatpush1.msra.mxu0 0.0
      %944 = vmatprep.subr.mxu0 0.0
      %945 = vmatpush1.msra.mxu0 0.0
      %946 = vmatprep.subr.mxu0 0.0
      %947 = vmatpush1.msra.mxu0 0.0
      %948 = vmatprep.subr.mxu0 0.0
      %949 = vmatpush1.msra.mxu0 0.0
      %950 = vmatprep.subr.mxu0 0.0
      %951 = vmatpush1.msra.mxu0 0.0
      %952 = vmatprep.subr.mxu0 0.0
      %953 = vmatpush1.msra.mxu0 0.0
      %954 = vmatprep.subr.mxu0 0.0
      %955 = vmatpush1.msra.mxu0 0.0
      %956 = vmatprep.subr.mxu0 0.0
      %957 = vmatpush1.msra.mxu0 0.0
      %958 = vmatprep.subr.mxu0 0.0
      %959 = vmatpush1.msra.mxu0 0.0
      %960 = vmatprep.subr.mxu0 0.0
      %961 = vmatpush1.msra.mxu0 0.0
      %962 = vmatprep.subr.mxu0 0.0
      %963 = vmatpush1.msra.mxu0 0.0
      %964 = vmatprep.subr.mxu0 0.0
      %965 = vmatpush1.msra.mxu0 0.0
      %966 = vmatprep.subr.mxu0 0.0
      %967 = vmatpush1.msra.mxu0 0.0
      %968 = vmatprep.subr.mxu0 0.0
      %969 = vmatpush1.msra.mxu0 0.0
      %970 = vmatprep.subr.mxu0 0.0
      %971 = vmatpush1.msra.mxu0 0.0
      %972 = vmatprep.subr.mxu0 0.0
      %973 = vmatpush1.msra.mxu0 0.0
      %974 = vmatprep.subr.mxu0 0.0
      %975 = vmatpush1.msra.mxu0 0.0
      %976 = vmatprep.subr.mxu0 0.0
      %977 = vmatpush1.msra.mxu0 0.0
      %978 = vmatprep.subr.mxu0 0.0
      %979 = vmatpush1.msra.mxu0 0.0
      %980 = vmatprep.subr.mxu0 0.0
      %981 = vmatpush1.msra.mxu0 0.0
      %982 = vmatprep.subr.mxu0 0.0
      %983 = vmatpush1.msra.mxu0 0.0
      %984 = vmatprep.subr.mxu0 0.0
      %985 = vmatpush1.msra.mxu0 0.0
      %986 = vmatprep.subr.mxu0 0.0
      %987 = vmatpush1.msra.mxu0 0.0
      %988 = vmatprep.subr.mxu0 0.0
      %989 = vmatpush1.msra.mxu0 0.0
      %990 = vmatprep.subr.mxu0 0.0
      %991 = vmatpush1.msra.mxu0 0.0
      %992 = vmatprep.subr.mxu0 0.0
      %993 = vmatpush1.msra.mxu0 0.0
      %994 = vmatprep.subr.mxu0 0.0
      %995 = vmatpush1.msra.mxu0 0.0
      %996 = vmatprep.subr.mxu0 0.0
      %997 = vmatpush1.msra.mxu0 0.0
      %998 = vmatprep.subr.mxu0 0.0
      %999 = vmatpush1.msra.mxu0 0.0
      %1000 = vmatprep.subr.mxu0 0.0
      %1001 = vmatpush1.msra.mxu0 0.0
      %1002 = vmatprep.subr.mxu0 0.0
      %1003 = vmatpush1.msra.mxu0 0.0
      %1004 = vmatprep.mubr.f32.mxu0 0.0
      %v1005 = vand.u32 %v711, 4294901760
      %v1006 = vsub.f32 %v711, %v1005
      %v1007 = vand.u32 %v1006, 4294901760
      %1008 = vmatmul.mubr.f32.gmra.mrb[0].mxu0 %v1007
      %v1009 = vpop.f32.mrb[0].mxu0
      %v1010 = vadd.f32 %v936, %v1009
      %v1011 = vpop.f32.mrb[0].mxu0
      %1012 = vdwg.mxu0
      %1013 = vmatprep.subr.mxu0 0.0
      %v1014 = vand.u32 %v707, 4294901760
      %v1015 = vsub.f32 %v707, %v1014
      %v1016 = vand.u32 %v1015, 4294901760
      %1017 = vmatpush1.msra.mxu0 %v1016
      %1018 = vmatprep.subr.mxu0 0.0
      %1019 = vmatpush1.msra.mxu0 0.0
      %1020 = vmatprep.subr.mxu0 0.0
      %1021 = vmatpush1.msra.mxu0 0.0
      %1022 = vmatprep.subr.mxu0 0.0
      %1023 = vmatpush1.msra.mxu0 0.0
      %1024 = vmatprep.subr.mxu0 0.0
      %1025 = vmatpush1.msra.mxu0 0.0
      %1026 = vmatprep.subr.mxu0 0.0
      %1027 = vmatpush1.msra.mxu0 0.0
      %1028 = vmatprep.subr.mxu0 0.0
      %1029 = vmatpush1.msra.mxu0 0.0
      %1030 = vmatprep.subr.mxu0 0.0
      %1031 = vmatpush1.msra.mxu0 0.0
      %1032 = vmatprep.subr.mxu0 0.0
      %1033 = vmatpush1.msra.mxu0 0.0
      %1034 = vmatprep.subr.mxu0 0.0
      %1035 = vmatpush1.msra.mxu0 0.0
      %1036 = vmatprep.subr.mxu0 0.0
      %1037 = vmatpush1.msra.mxu0 0.0
      %1038 = vmatprep.subr.mxu0 0.0
      %1039 = vmatpush1.msra.mxu0 0.0
      %1040 = vmatprep.subr.mxu0 0.0
      %1041 = vmatpush1.msra.mxu0 0.0
      %1042 = vmatprep.subr.mxu0 0.0
      %1043 = vmatpush1.msra.mxu0 0.0
      %1044 = vmatprep.subr.mxu0 0.0
      %1045 = vmatpush1.msra.mxu0 0.0
      %1046 = vmatprep.subr.mxu0 0.0
      %1047 = vmatpush1.msra.mxu0 0.0
      %1048 = vmatprep.subr.mxu0 0.0
      %1049 = vmatpush1.msra.mxu0 0.0
      %1050 = vmatprep.subr.mxu0 0.0
      %1051 = vmatpush1.msra.mxu0 0.0
      %1052 = vmatprep.subr.mxu0 0.0
      %1053 = vmatpush1.msra.mxu0 0.0
      %1054 = vmatprep.subr.mxu0 0.0
      %1055 = vmatpush1.msra.mxu0 0.0
      %1056 = vmatprep.subr.mxu0 0.0
      %1057 = vmatpush1.msra.mxu0 0.0
      %1058 = vmatprep.subr.mxu0 0.0
      %1059 = vmatpush1.msra.mxu0 0.0
      %1060 = vmatprep.subr.mxu0 0.0
      %1061 = vmatpush1.msra.mxu0 0.0
      %1062 = vmatprep.subr.mxu0 0.0
      %1063 = vmatpush1.msra.mxu0 0.0
      %1064 = vmatprep.subr.mxu0 0.0
      %1065 = vmatpush1.msra.mxu0 0.0
      %1066 = vmatprep.subr.mxu0 0.0
      %1067 = vmatpush1.msra.mxu0 0.0
      %1068 = vmatprep.subr.mxu0 0.0
      %1069 = vmatpush1.msra.mxu0 0.0
      %1070 = vmatprep.subr.mxu0 0.0
      %1071 = vmatpush1.msra.mxu0 0.0
      %1072 = vmatprep.subr.mxu0 0.0
      %1073 = vmatpush1.msra.mxu0 0.0
      %1074 = vmatprep.subr.mxu0 0.0
      %1075 = vmatpush1.msra.mxu0 0.0
      %1076 = vmatprep.subr.mxu0 0.0
      %1077 = vmatpush1.msra.mxu0 0.0
      %1078 = vmatprep.subr.mxu0 0.0
      %1079 = vmatpush1.msra.mxu0 0.0
      %1080 = vmatprep.mubr.f32.mxu0 0.0
      %v1081 = vand.u32 %v711, 4294901760
      %1082 = vmatmul.mubr.f32.gmra.mrb[0].mxu0 %v1081
      %v1083 = vpop.f32.mrb[0].mxu0
      %v1084 = vadd.f32 %v1010, %v1083
      %v1085 = vpop.f32.mrb[0].mxu0
      %1086 = vdwg.mxu0
      %1087 = vmatprep.subr.mxu0 0.0
      %v1088 = vand.u32 %v707, 4294901760
      %1089 = vmatpush1.msra.mxu0 %v1088
      %1090 = vmatprep.subr.mxu0 0.0
      %1091 = vmatpush1.msra.mxu0 0.0
      %1092 = vmatprep.subr.mxu0 0.0
      %1093 = vmatpush1.msra.mxu0 0.0
      %1094 = vmatprep.subr.mxu0 0.0
      %1095 = vmatpush1.msra.mxu0 0.0
      %1096 = vmatprep.subr.mxu0 0.0
      %1097 = vmatpush1.msra.mxu0 0.0
      %1098 = vmatprep.subr.mxu0 0.0
      %1099 = vmatpush1.msra.mxu0 0.0
      %1100 = vmatprep.subr.mxu0 0.0
      %1101 = vmatpush1.msra.mxu0 0.0
      %1102 = vmatprep.subr.mxu0 0.0
      %1103 = vmatpush1.msra.mxu0 0.0
      %1104 = vmatprep.subr.mxu0 0.0
      %1105 = vmatpush1.msra.mxu0 0.0
      %1106 = vmatprep.subr.mxu0 0.0
      %1107 = vmatpush1.msra.mxu0 0.0
      %1108 = vmatprep.subr.mxu0 0.0
      %1109 = vmatpush1.msra.mxu0 0.0
      %1110 = vmatprep.subr.mxu0 0.0
      %1111 = vmatpush1.msra.mxu0 0.0
      %1112 = vmatprep.subr.mxu0 0.0
      %1113 = vmatpush1.msra.mxu0 0.0
      %1114 = vmatprep.subr.mxu0 0.0
      %1115 = vmatpush1.msra.mxu0 0.0
      %1116 = vmatprep.subr.mxu0 0.0
      %1117 = vmatpush1.msra.mxu0 0.0
      %1118 = vmatprep.subr.mxu0 0.0
      %1119 = vmatpush1.msra.mxu0 0.0
      %1120 = vmatprep.subr.mxu0 0.0
      %1121 = vmatpush1.msra.mxu0 0.0
      %1122 = vmatprep.subr.mxu0 0.0
      %1123 = vmatpush1.msra.mxu0 0.0
      %1124 = vmatprep.subr.mxu0 0.0
      %1125 = vmatpush1.msra.mxu0 0.0
      %1126 = vmatprep.subr.mxu0 0.0
      %1127 = vmatpush1.msra.mxu0 0.0
      %1128 = vmatprep.subr.mxu0 0.0
      %1129 = vmatpush1.msra.mxu0 0.0
      %1130 = vmatprep.subr.mxu0 0.0
      %1131 = vmatpush1.msra.mxu0 0.0
      %1132 = vmatprep.subr.mxu0 0.0
      %1133 = vmatpush1.msra.mxu0 0.0
      %1134 = vmatprep.subr.mxu0 0.0
      %1135 = vmatpush1.msra.mxu0 0.0
      %1136 = vmatprep.subr.mxu0 0.0
      %1137 = vmatpush1.msra.mxu0 0.0
      %1138 = vmatprep.subr.mxu0 0.0
      %1139 = vmatpush1.msra.mxu0 0.0
      %1140 = vmatprep.subr.mxu0 0.0
      %1141 = vmatpush1.msra.mxu0 0.0
      %1142 = vmatprep.subr.mxu0 0.0
      %1143 = vmatpush1.msra.mxu0 0.0
      %1144 = vmatprep.subr.mxu0 0.0
      %1145 = vmatpush1.msra.mxu0 0.0
      %1146 = vmatprep.subr.mxu0 0.0
      %1147 = vmatpush1.msra.mxu0 0.0
      %1148 = vmatprep.subr.mxu0 0.0
      %1149 = vmatpush1.msra.mxu0 0.0
      %1150 = vmatprep.subr.mxu0 0.0
      %1151 = vmatpush1.msra.mxu0 0.0
      %1152 = vmatprep.mubr.f32.mxu0 0.0
      %v1153 = vand.u32 %v711, 4294901760
      %1154 = vmatmul.mubr.f32.gmra.mrb[0].mxu0 %v1153
      %v1155 = vpop.f32.mrb[0].mxu0
      %v1156 = vadd.f32 %v1084, %v1155
      %v1157 = vpop.f32.mrb[0].mxu0
      %1158 = vdwg.mxu0
      %v1159 = vadd.f32 %v1156, 3.0
      %v1160 = vmax.f32 %v1159, 0.0
      %v1161 = vmin.f32 %v1160, 6.0
      %v1162 = vmul.f32 %v1161, 0.16666667
      %v1163 = vlaneseq
      %v1164 = vshrl.u32 %v1163, 7
      %v1165 = vsub.s32 0, %v1164
      %v1166 = vrot.slane %v1162, %v1165
      %1168 = vbcast.lane.b32.xlu0 %v1166, 256
      %v1169 = vpop.permute.xlu0 %1168
      %s1171 = sor.u32 256, 8
      %1172 = vbcast.lane.b32.xlu0 %v1166, %s1171
      %v1173 = vpop.permute.xlu0 %1172
      %v1174 = vmul.f32 %v225, %v1169
      %v1175 = vmul.f32 %v226, %v1169
      %v1176 = vmul.f32 %v227, %v1173
      %v1177 = vmul.f32 %v228, %v1173
      %1178 = vst [vmem:[%s224] sm:$0xff] %v1174
      %1179 = vst [vmem:[%s224 + $0x8] sm:$0xff] %v1175
      %1180 = vst [vmem:[%s224 + $0x10] sm:$0xff] %v1176
      %1181 = vst [vmem:[%s224 + $0x18] sm:$0xff] %v1177
      %p1182 = scmp.lt.s32.totalorder %s16, 3
      %s1183 = scalar_select %p1182, %s16, 3
      %s1184 = smul.addr %s1183, 4
      %s1185 = smul.addr %s1184, 8
      %s1186 = scalar_lea.vmem %s5, %s1185
      // Predicated region
      $region41: #{se_layer.1} parent=39 // pred_check
        %p1187 = pneg %p144
      $region42: #{se_layer.1} parent=39 // pred_check_branch
        %1189 = sbr.rel (%p1187) target = $region44
      $region43: #{se_layer.1} parent=39 // pred_region
        _
      $region44: #{se_layer.1} parent=39 // pred_fallthru
        _
    $region40: #{se_layer.1} parent=5 // pred_fallthru
      _
    %p1190 = scmp.le.s32.totalorder 2, %s11
    // Predicated region
    $region45: #{se_layer.1} parent=5 // pred_check
      %p1191 = pneg %p1190
    $region46: #{se_layer.1} parent=5 // pred_check_branch
      %1193 = sbr.rel (%p1191) target = $region48
    $region47: #{se_layer.1} parent=5 // pred_region
      %s1194 = ssub.s32 %s11, 2
      // Predicated region
      $region49: #{se_layer.1} parent=47 // pred_check
        %p1195 = pneg %p150
      $region50: #{se_layer.1} parent=47 // pred_check_branch
        %1197 = sbr.rel (%p1195) target = $region52
      $region51: #{se_layer.1} parent=47 // pred_region
        %p1198 = scmp.lt.s32.totalorder %s17, 3
        %s1199 = scalar_select %p1198, %s17, 3
        %s1200 = smul.addr %s1199, 4
        %s1201 = smul.addr %s1200, 8
        %s1202 = scalar_lea.vmem %s5, %s1201
      $region52: #{se_layer.1} parent=47 // pred_fallthru
        _
    $region48: #{se_layer.1} parent=5 // pred_fallthru
      _
  $region6: #{se_layer.1} parent=0 // loop_footer
    %s15 = sadd.s32 1, %s11
  $region7: #{se_layer.1} parent=0 // loop_footer_branch
    %10 = sbr.rel target = $region3
  $region8: #{se_layer.1} parent=0 // loop_exit
    _

</llo_original>
